<compile_context>
chip_gen: v7x
topology: tpu7x:2x2x1
jax: 0.10.0
libtpu: 0.0.40
codegen_flags: <defaults>
</compile_context>

<pallas_src>
import functools

import jax
import jax.numpy as jnp
from jax import lax
from jax.experimental import pallas as pl
from jax.experimental.pallas import tpu as pltpu


# -----------------------------------------------------------------------------
# Kernel A: conv-as-matmul feature projection, both images in one call.
#   f = (patches @ Wf) * C**-0.25     (bf16 in, f32 MXU accumulation, bf16 out)
# C**-0.25 applied to both feature maps == 1/sqrt(C) on the correlation.
# -----------------------------------------------------------------------------
def _proj_kernel(p_ref, w_ref, f_ref, *, scale):
    f = jnp.dot(p_ref[...], w_ref[...], preferred_element_type=jnp.float32)
    f_ref[...] = (f * scale).astype(f_ref.dtype)


def project_patches(patches, w_feat, scale):
    n_rows = patches.shape[0]
    c_feat = w_feat.shape[1]
    return pl.pallas_call(
        functools.partial(_proj_kernel, scale=scale),
        out_shape=jax.ShapeDtypeStruct((n_rows, c_feat), jnp.bfloat16),
    )(patches, w_feat)


# -----------------------------------------------------------------------------
# Kernel B: bidirectional flash-style dense matcher.
#
# Grid (i, j) over (query tiles of A, kv tiles of B).  Per tile:
#   s = f_A[i] @ f_B[j]^T                       (bf16 MXU, f32 accumulation)
# Row direction (A->B):   online softmax over j (scratch m_r/l_r/acc_r,
#   reset at j==0, finalized into the i-th output block at j==last).
# Column direction (B->A): online softmax over i.  Its running state is kept
#   lane-dense, one slot per kv tile (shape (nj, *, tk)), and finalized into a
#   resident (nj, *, tk) output at i==last.
# cert = max(softmax row) = 1/l, so no extra tracking and no normalized attn.
# -----------------------------------------------------------------------------
def _bidir_match_kernel(fa_ref, fb_ref, ck_ref, cqt_ref,
                        wab_ref, cab_ref, wba_ref, cba_ref,
                        m_r, l_r, acc_r, m_c, l_c, acc_c):
    i = pl.program_id(0)
    j = pl.program_id(1)
    ni = pl.num_programs(0)
    nj = pl.num_programs(1)

    # One (tq, tk) tile of the shared correlation matrix.
    s = lax.dot_general(fa_ref[...], fb_ref[...], (((1,), (1,)), ((), ())),
                        preferred_element_type=jnp.float32)        # (tq, tk)

    # ---------------- direction A->B: online softmax across j ----------------
    @pl.when(j == 0)
    def _():
        m_r[...] = jnp.full_like(m_r, -jnp.inf)
        l_r[...] = jnp.zeros_like(l_r)
        acc_r[...] = jnp.zeros_like(acc_r)

    m_new = jnp.maximum(m_r[...], jnp.max(s, axis=1, keepdims=True))  # (tq,1)
    a_r = jnp.exp(m_r[...] - m_new)
    e_r = jnp.exp(s - m_new)                                          # (tq,tk)
    l_r[...] = a_r * l_r[...] + jnp.sum(e_r, axis=1, keepdims=True)
    acc_r[...] = a_r * acc_r[...] + jnp.dot(e_r, ck_ref[...],
                                            preferred_element_type=jnp.float32)
    m_r[...] = m_new

    @pl.when(j == nj - 1)
    def _():
        inv_l = pl.reciprocal(l_r[...], approx=True)   # cert = max softmax = 1/l
        wab_ref[...] = acc_r[...] * inv_l
        cab_ref[...] = inv_l

    # ---------------- direction B->A: online softmax across i ----------------
    tk = s.shape[1]

    @pl.when(i == 0)
    def _():
        m_c[j] = jnp.full((1, tk), -jnp.inf, jnp.float32)
        l_c[j] = jnp.zeros((1, tk), jnp.float32)
        acc_c[j] = jnp.zeros((2, tk), jnp.float32)

    mc_old = m_c[j]                                                   # (1,tk)
    mc_new = jnp.maximum(mc_old, jnp.max(s, axis=0, keepdims=True))
    a_c = jnp.exp(mc_old - mc_new)
    e_c = jnp.exp(s - mc_new)                                         # (tq,tk)
    l_c[j] = a_c * l_c[j] + jnp.sum(e_c, axis=0, keepdims=True)
    acc_c[j] = a_c * acc_c[j] + jnp.dot(cqt_ref[...], e_c,
                                        preferred_element_type=jnp.float32)
    m_c[j] = mc_new

    @pl.when(i == ni - 1)
    def _():
        inv_lc = pl.reciprocal(l_c[j], approx=True)                   # (1,tk)
        wba_ref[j] = acc_c[j] * inv_lc                                # (2,tk)
        cba_ref[j] = inv_lc                                           # (1,tk)


def symmetric_match(f_a, f_b, coords, *, tq=128, tk=128):
    """f_a, f_b: (N, C) bf16 features (correlation temperature already folded
    in).  coords: (N, 2) f32 normalized grid.  Returns
    (warp_ab (N,2), cert_ab (N,), warp_ba (N,2), cert_ba (N,))."""
    N, C = f_a.shape
    if N % 128 == 0:
        tq, tk = min(tq, N), min(tk, N)
    else:  # small / odd grids: single monolithic tile
        tq = tk = N
    ni, nj = N // tq, N // tk
    coords_t = coords.T                                               # (2, N)

    warp_ab, cert_ab, warp_ba_t, cert_ba_t = pl.pallas_call(
        _bidir_match_kernel,
        grid=(ni, nj),
        in_specs=(
            pl.BlockSpec((tq, C), lambda i, j: (i, 0)),               # f_A tile
            pl.BlockSpec((tk, C), lambda i, j: (j, 0)),               # f_B tile
            pl.BlockSpec((tk, 2), lambda i, j: (j, 0)),               # coords (kv)
            pl.BlockSpec((2, tq), lambda i, j: (0, i)),               # coords^T (q)
        ),
        out_specs=(
            pl.BlockSpec((tq, 2), lambda i, j: (i, 0)),
            pl.BlockSpec((tq, 1), lambda i, j: (i, 0)),
            pl.BlockSpec((nj, 2, tk), lambda i, j: (0, 0, 0)),        # resident
            pl.BlockSpec((nj, 1, tk), lambda i, j: (0, 0, 0)),        # resident
        ),
        out_shape=(
            jax.ShapeDtypeStruct((N, 2), jnp.float32),
            jax.ShapeDtypeStruct((N, 1), jnp.float32),
            jax.ShapeDtypeStruct((nj, 2, tk), jnp.float32),
            jax.ShapeDtypeStruct((nj, 1, tk), jnp.float32),
        ),
        scratch_shapes=[
            pltpu.VMEM((tq, 1), jnp.float32),     # m_r
            pltpu.VMEM((tq, 1), jnp.float32),     # l_r
            pltpu.VMEM((tq, 2), jnp.float32),     # acc_r
            pltpu.VMEM((nj, 1, tk), jnp.float32), # m_c
            pltpu.VMEM((nj, 1, tk), jnp.float32), # l_c
            pltpu.VMEM((nj, 2, tk), jnp.float32), # acc_c
        ],
        compiler_params=pltpu.CompilerParams(
            dimension_semantics=("arbitrary", "arbitrary")),
    )(f_a, f_b, coords, coords_t)

    warp_ba = warp_ba_t.transpose(0, 2, 1).reshape(N, 2)
    cert_ba = cert_ba_t.reshape(N)
    return warp_ab, cert_ab[:, 0], warp_ba, cert_ba


# -----------------------------------------------------------------------------
# Kernel C: row-tiled Gaussian KDE (RoMa `kde`):
#   density_i = sum_j exp(-||x_i - x_j||^2 / (2*std^2))
# Grid (row tile, col tile); running sum over column tiles in VMEM scratch.
# -----------------------------------------------------------------------------
def _kde_kernel(xr_ref, xc_ref, dens_ref, acc_ref, *, inv_two_var):
    j = pl.program_id(1)

    @pl.when(j == 0)
    def _():
        acc_ref[...] = jnp.zeros_like(acc_ref)

    xr = xr_ref[...]                                                  # (tr, 4)
    xc = xc_ref[...]                                                  # (tc, 4)
    sq_r = jnp.sum(xr * xr, axis=-1, keepdims=True)                   # (tr, 1)
    sq_c = jnp.sum(xc * xc, axis=-1, keepdims=True)                   # (tc, 1)
    gram = lax.dot_general(xr, xc, (((1,), (1,)), ((), ())),
                           preferred_element_type=jnp.float32)        # (tr, tc)
    # broadcast sq_c across rows via a rank-1 matmul (avoids a vector transpose)
    sq_c_row = lax.dot_general(jnp.ones_like(sq_r), sq_c,
                               (((1,), (1,)), ((), ())),
                               preferred_element_type=jnp.float32)    # (tr, tc)
    d2 = jnp.maximum(sq_r + sq_c_row - 2.0 * gram, 0.0)
    acc_ref[...] += jnp.sum(jnp.exp(-d2 * inv_two_var), axis=-1, keepdims=True)

    @pl.when(j == pl.num_programs(1) - 1)
    def _():
        dens_ref[...] = acc_ref[...]


def _pick_tile(n, pref):
    t = pref
    while t > 8 and n % t:
        t //= 2
    return t if n % t == 0 else n


def kde(x, std=0.1, tile=128):
    M = x.shape[0]
    t = _pick_tile(M, tile)
    dens = pl.pallas_call(
        functools.partial(_kde_kernel, inv_two_var=1.0 / (2.0 * std * std)),
        grid=(M // t, M // t),
        in_specs=(
            pl.BlockSpec((t, 4), lambda i, j: (i, 0)),
            pl.BlockSpec((t, 4), lambda i, j: (j, 0)),
        ),
        out_specs=pl.BlockSpec((t, 1), lambda i, j: (i, 0)),
        out_shape=jax.ShapeDtypeStruct((M, 1), jnp.float32),
        scratch_shapes=[pltpu.VMEM((t, 1), jnp.float32)],
        compiler_params=pltpu.CompilerParams(
            dimension_semantics=("parallel", "arbitrary")),
    )(x, x)
    return dens[:, 0]


# -----------------------------------------------------------------------------
# Glue (plain JAX): patch extraction, normalized grid, sampling, pixel coords.
# -----------------------------------------------------------------------------
def extract_patches(img, kernel=3, stride=2):
    """img: (3, H, W) -> (N = Hc*Wc, K = 3*kernel*kernel) row-major patches."""
    p = lax.conv_general_dilated_patches(
        img[None], filter_shape=(kernel, kernel),
        window_strides=(stride, stride), padding=((1, 1), (1, 1)))
    _, K, Hc, Wc = p.shape
    return p[0].reshape(K, Hc * Wc).T, Hc, Wc


def norm_grid(Hc, Wc):
    xs = (jnp.arange(Wc, dtype=jnp.float32) + 0.5) / Wc * 2.0 - 1.0
    ys = (jnp.arange(Hc, dtype=jnp.float32) + 0.5) / Hc * 2.0 - 1.0
    gy, gx = jnp.meshgrid(ys, xs, indexing="ij")
    return jnp.stack([gx, gy], axis=-1).reshape(-1, 2)                # (N, 2)


def make_params(key, k_in=27, k_pad=32, c_feat=128):
    w = jax.random.normal(key, (k_pad, c_feat), jnp.float32)
    w = w * (1.0 / float(k_in) ** 0.5)
    w = w.at[k_in:].set(0.0)        # rows matching zero-padded patch columns
    return {"w_feat": w}


def roma_forward(data, params, config, rng):
    if config["load_img_in_model"]:
        img0, img1 = data["image0_path"][0], data["image1_path"][0]
    else:
        img0, img1 = data["image0_rgb_origin"][0], data["image1_rgb_origin"][0]
    H_A, W_A = data["origin_img_size0"][0][0], data["origin_img_size0"][0][1]
    H_B, W_B = data["origin_img_size1"][0][0], data["origin_img_size1"][0][1]

    # ---- model.match(img0, img1): projection (Kernel A) + symmetric dense
    # matcher (Kernel B, single shared correlation for both directions) ----
    p0, Hc, Wc = extract_patches(img0)
    p1, _, _ = extract_patches(img1)
    N = Hc * Wc
    Kp, C = params["w_feat"].shape
    pad = Kp - p0.shape[1]
    patches = jnp.concatenate([p0, p1], axis=0)                       # (2N, K)
    patches = jnp.pad(patches, ((0, 0), (0, pad))).astype(jnp.bfloat16)
    w_bf16 = params["w_feat"].astype(jnp.bfloat16)
    feats = project_patches(patches, w_bf16, scale=float(C) ** -0.25)
    f_a, f_b = feats[:N], feats[N:]                                   # bf16

    coords = norm_grid(Hc, Wc)
    warp_ab, cert_ab, warp_ba, cert_ba = symmetric_match(f_a, f_b, coords)

    q_warp = jnp.concatenate([coords, warp_ab], -1).reshape(Hc, Wc, 4)
    s_warp = jnp.concatenate([warp_ba, coords], -1).reshape(Hc, Wc, 4)
    warp = jnp.concatenate([q_warp, s_warp], axis=1)                  # (Hc,2Wc,4)
    dense_certainty = jnp.concatenate(
        [cert_ab.reshape(Hc, Wc), cert_ba.reshape(Hc, Wc)], axis=1)

    # ---- model.sample(warp, dense_certainty, num=n_sample) ----
    num = config["n_sample"]
    certainty = dense_certainty.reshape(-1)
    certainty = jnp.where(certainty > 0.05, 1.0, certainty)           # sample_thresh
    matches_flat = warp.reshape(-1, 4)
    k1, k2 = jax.random.split(rng)
    n_tot = certainty.shape[0]
    n_exp = min(4 * num, n_tot)                                       # balanced expansion
    # torch.multinomial(..., replacement=False) -> Gumbel top-k (deterministic)
    scores = jnp.log(jnp.maximum(certainty, 1e-12)) + jax.random.gumbel(k1, (n_tot,))
    _, good_idx = lax.top_k(scores, n_exp)
    good_matches = matches_flat[good_idx]
    good_certainty = certainty[good_idx]
    density = kde(good_matches, std=0.1)                              # Kernel C
    p = 1.0 / (density + 1.0)
    p = jnp.where(density < 10.0, 1e-7, p)
    scores2 = jnp.log(p) + jax.random.gumbel(k2, p.shape)
    _, bal_idx = lax.top_k(scores2, min(num, n_exp))
    matches_s = good_matches[bal_idx]
    conf_s = good_certainty[bal_idx]

    # ---- model.to_pixel_coordinates + bounds mask (plain JAX, fused by XLA;
    # a pallas_call for a 64x4 elementwise op costs more than the math) ----
    kpts0 = jnp.stack([W_A * 0.5 * (matches_s[:, 0] + 1.0),
                       H_A * 0.5 * (matches_s[:, 1] + 1.0)], axis=-1)
    kpts1 = jnp.stack([W_B * 0.5 * (matches_s[:, 2] + 1.0),
                       H_B * 0.5 * (matches_s[:, 3] + 1.0)], axis=-1)
    mask = ((kpts0[:, 0] <= img0.shape[-1] - 1)
            & (kpts0[:, 1] <= img0.shape[-2] - 1)
            & (kpts1[:, 0] <= img1.shape[-1] - 1)
            & (kpts1[:, 1] <= img1.shape[-2] - 1))

    out = dict(data)
    # NOTE: JAX cannot return variable-length boolean-masked arrays, so we keep
    # fixed-size arrays plus the boolean mask (PyTorch applies kpts0[mask], ...).
    out.update({
        "m_bids": jnp.zeros_like(kpts0[:, 0]),
        "mkpts0_f": kpts0,
        "mkpts1_f": kpts1,
        "mconf": conf_s,
        "match_mask": mask,
    })
    # TODO(synk): 'query_points' branch (model.warp_keypoints = bilinear
    # grid_sample gather of the dense warp) is a data-dependent gather with no
    # clean Pallas equivalent here; omitted rather than faked.
    return out


if __name__ == "__main__":
    key = jax.random.PRNGKey(0)
    k_img0, k_img1, k_w, k_sample, k_fa, k_fb, k_x, k_p = jax.random.split(key, 8)

    H, W = 32, 32
    img0 = jax.random.uniform(k_img0, (3, H, W), jnp.float32)
    img1 = jax.random.uniform(k_img1, (3, H, W), jnp.float32)

    data = {
        "image0_rgb_origin": img0[None],                              # (1, 3, 32, 32)
        "image1_rgb_origin": img1[None],                              # (1, 3, 32, 32)
        "origin_img_size0": jnp.array([[float(H), float(W)]], jnp.float32),
        "origin_img_size1": jnp.array([[float(H), float(W)]], jnp.float32),
    }
    config = {"load_img_in_model": False, "n_sample": 64}
    params = make_params(k_w)

    out = roma_forward(data, params, config, k_sample)
    jax.block_until_ready(out["mkpts0_f"])
    jax.block_until_ready(out["mkpts1_f"])
    jax.block_until_ready(out["mconf"])
    jax.block_until_ready(out["match_mask"])

    assert out["mkpts0_f"].shape == (config["n_sample"], 2)
    assert out["mkpts1_f"].shape == (config["n_sample"], 2)
    assert out["mconf"].shape == (config["n_sample"],)
    assert out["match_mask"].dtype == jnp.bool_

    # ---- numerical validation of the Pallas kernels vs plain-JAX references --
    # Bidirectional flash matcher (exercises both online-softmax paths: 2x2 grid)
    Nv, Cv = 256, 128
    f_a = jax.random.normal(k_fa, (Nv, Cv), jnp.float32).astype(jnp.bfloat16)
    f_b = jax.random.normal(k_fb, (Nv, Cv), jnp.float32).astype(jnp.bfloat16)
    coords_v = norm_grid(16, 16)
    wab, cab, wba, cba = symmetric_match(f_a, f_b, coords_v)
    fa32, fb32 = f_a.astype(jnp.float32), f_b.astype(jnp.float32)
    corr = fa32 @ fb32.T
    p_ab = jax.nn.softmax(corr, axis=-1)
    p_ba = jax.nn.softmax(corr.T, axis=-1)
    assert jnp.allclose(wab, p_ab @ coords_v, atol=5e-3, rtol=5e-2)
    assert jnp.allclose(cab, p_ab.max(-1), atol=2e-3, rtol=5e-2)
    assert jnp.allclose(wba, p_ba @ coords_v, atol=5e-3, rtol=5e-2)
    assert jnp.allclose(cba, p_ba.max(-1), atol=2e-3, rtol=5e-2)

    # Tiled KDE
    xs = jax.random.uniform(k_x, (256, 4), jnp.float32) * 2.0 - 1.0
    dens = kde(xs, std=0.1)
    diff = xs[:, None, :] - xs[None, :, :]
    dens_ref = jnp.exp(-jnp.sum(diff * diff, -1) / (2.0 * 0.01)).sum(-1)
    assert jnp.allclose(dens, dens_ref, atol=5e-2, rtol=2e-2)

    # Projection
    pchk = jax.random.uniform(k_p, (64, 32), jnp.float32).astype(jnp.bfloat16)
    wchk = params["w_feat"].astype(jnp.bfloat16)
    fchk = project_patches(pchk, wchk, scale=float(128) ** -0.25)
    fref = (pchk.astype(jnp.float32) @ wchk.astype(jnp.float32)) * float(128) ** -0.25
    assert jnp.allclose(fchk.astype(jnp.float32), fref, atol=5e-2, rtol=2e-2)

    print("KERNEL_OK")
</pallas_src>

<mosaic_0001>
module attributes {stable_mosaic.version = 11 : i64} {
  func.func @_proj_kernel(%arg0: memref<512x32xbf16, #tpu.memory_space<vmem>>, %arg1: memref<32x128xbf16, #tpu.memory_space<vmem>>, %arg2: memref<512x128xbf16, #tpu.memory_space<vmem>>) attributes {dimension_semantics = [], scalar_prefetch = 0 : i64, scratch_operands = 0 : i64, tpu.core_type = #tpu.core_type<tc>} {
    %c0 = arith.constant 0 : index
    %c0_0 = arith.constant 0 : index
    %0 = vector.load %arg0[%c0, %c0_0] : memref<512x32xbf16, #tpu.memory_space<vmem>>, vector<512x32xbf16>
    %c0_1 = arith.constant 0 : index
    %c0_2 = arith.constant 0 : index
    %1 = vector.load %arg1[%c0_1, %c0_2] : memref<32x128xbf16, #tpu.memory_space<vmem>>, vector<32x128xbf16>
    %cst = arith.constant dense<0.000000e+00> : vector<512x128xf32>
    %2 = tpu.matmul %0, %1, %cst {dimension_numbers = #tpu.dot_dimension_numbers<[1], [0], [0], [1], [0, 0, 1, 1], [], []>} : vector<512x32xbf16>, vector<32x128xbf16>, vector<512x128xf32> -> vector<512x128xf32>
    %cst_3 = arith.constant 0.297301769 : f32
    %3 = vector.broadcast %cst_3 : f32 to vector<512x128xf32>
    %4 = arith.mulf %2, %3 : vector<512x128xf32>
    %5 = arith.truncf %4 : vector<512x128xf32> to vector<512x128xbf16>
    %c0_4 = arith.constant 0 : index
    %c0_5 = arith.constant 0 : index
    %6 = vector.load %arg2[%c0_4, %c0_5] : memref<512x128xbf16, #tpu.memory_space<vmem>>, vector<512x128xbf16>
    tpu.vector_store %arg2[%c0_4, %c0_5], %5 {strides = array<i32>} : memref<512x128xbf16, #tpu.memory_space<vmem>>, vector<512x128xbf16>,
    return
  }
}

</mosaic_0001>

<llo_original>
// kernel: tpu_custom_call.1
$region0: #{tpu_custom_call.1}
  #allocation0 [shape = 'u32[]', space=smem, size = 0x4, offset = 0x4, fixed_abs, tag = 'smem constant byte address 0x4 - core index']
  #allocation1 [shape = 'u32[144,128]{1,0:T(1,128)}', space=vmem, size = 0x12000, scoped, tag = 'internal scratch']
  %s0 = inlined_call_operand.vmem [shape: bf16[512,32], index: 0, kind: input, shape index: {}]
  %s1 = inlined_call_operand.vmem [shape: bf16[32,128], index: 1, kind: input, shape index: {}]
  %s2 = inlined_call_operand.hbm [shape: bf16[512,128], index: 2, kind: output, shape index: {}]
  %s3 = sld [smem:[#allocation0]]
  $region18: #{tpu_custom_call.1} parent=0
    _
  %s5 = ssub.s32 1, %s3
  %s6 = scalar_select 0, %s5, %s3
  $region1: #{tpu_custom_call.1} parent=0
    #allocation2 [shape = 'u8[131072]{0}', space=vmem, size = 0x20000, scoped, tag = 'output window, operand 0, single buffered']
    #allocation3 [shape = 's32[1]{0}', space=sflag, size = 0x4, scoped, tag = 'scoped memory for tpu_custom_call.1']
    %7 = vsyncpa [#allocation3], 0
    // Predicated region
    $region2: #{tpu_custom_call.1} parent=1 // pred_check
      _
    $region3: #{tpu_custom_call.1} parent=1 // pred_check_branch
      %9 = sbr.rel (0) target = $region5
    $region4: #{tpu_custom_call.1} parent=1 // pred_region
      _
    $region5: #{tpu_custom_call.1} parent=1 // pred_fallthru
      _
    // Predicated region
    $region6: #{tpu_custom_call.1} parent=1 // pred_check
      _
    $region7: #{tpu_custom_call.1} parent=1 // pred_check_branch
      %11 = sbr.rel (0) target = $region9
    $region8: #{tpu_custom_call.1} parent=1 // pred_region
      _
    $region9: #{tpu_custom_call.1} parent=1 // pred_fallthru
      _
    %v13 = vld [vmem:[%s0] sm:$0xf]
    %v14 = vld [vmem:[%s0 + $0x4] sm:$0xf]
    %v15 = vld [vmem:[%s0 + $0x8] sm:$0xf]
    %v16 = vld [vmem:[%s0 + $0xc] sm:$0xf]
    %v17 = vld [vmem:[%s0 + $0x10] sm:$0xf]
    %v18 = vld [vmem:[%s0 + $0x14] sm:$0xf]
    %v19 = vld [vmem:[%s0 + $0x18] sm:$0xf]
    %v20 = vld [vmem:[%s0 + $0x1c] sm:$0xf]
    %v21 = vld [vmem:[%s0 + $0x20] sm:$0xf]
    %v22 = vld [vmem:[%s0 + $0x24] sm:$0xf]
    %v23 = vld [vmem:[%s0 + $0x28] sm:$0xf]
    %v24 = vld [vmem:[%s0 + $0x2c] sm:$0xf]
    %v25 = vld [vmem:[%s0 + $0x30] sm:$0xf]
    %v26 = vld [vmem:[%s0 + $0x34] sm:$0xf]
    %v27 = vld [vmem:[%s0 + $0x38] sm:$0xf]
    %v28 = vld [vmem:[%s0 + $0x3c] sm:$0xf]
    %v29 = vld [vmem:[%s0 + $0x40] sm:$0xf]
    %v30 = vld [vmem:[%s0 + $0x44] sm:$0xf]
    %v31 = vld [vmem:[%s0 + $0x48] sm:$0xf]
    %v32 = vld [vmem:[%s0 + $0x4c] sm:$0xf]
    %v33 = vld [vmem:[%s0 + $0x50] sm:$0xf]
    %v34 = vld [vmem:[%s0 + $0x54] sm:$0xf]
    %v35 = vld [vmem:[%s0 + $0x58] sm:$0xf]
    %v36 = vld [vmem:[%s0 + $0x5c] sm:$0xf]
    %v37 = vld [vmem:[%s0 + $0x60] sm:$0xf]
    %v38 = vld [vmem:[%s0 + $0x64] sm:$0xf]
    %v39 = vld [vmem:[%s0 + $0x68] sm:$0xf]
    %v40 = vld [vmem:[%s0 + $0x6c] sm:$0xf]
    %v41 = vld [vmem:[%s0 + $0x70] sm:$0xf]
    %v42 = vld [vmem:[%s0 + $0x74] sm:$0xf]
    %v43 = vld [vmem:[%s0 + $0x78] sm:$0xf]
    %v44 = vld [vmem:[%s0 + $0x7c] sm:$0xf]
    %v45 = vld [vmem:[%s0 + $0x80] sm:$0xf]
    %v46 = vld [vmem:[%s0 + $0x84] sm:$0xf]
    %v47 = vld [vmem:[%s0 + $0x88] sm:$0xf]
    %v48 = vld [vmem:[%s0 + $0x8c] sm:$0xf]
    %v49 = vld [vmem:[%s0 + $0x90] sm:$0xf]
    %v50 = vld [vmem:[%s0 + $0x94] sm:$0xf]
    %v51 = vld [vmem:[%s0 + $0x98] sm:$0xf]
    %v52 = vld [vmem:[%s0 + $0x9c] sm:$0xf]
    %v53 = vld [vmem:[%s0 + $0xa0] sm:$0xf]
    %v54 = vld [vmem:[%s0 + $0xa4] sm:$0xf]
    %v55 = vld [vmem:[%s0 + $0xa8] sm:$0xf]
    %v56 = vld [vmem:[%s0 + $0xac] sm:$0xf]
    %v57 = vld [vmem:[%s0 + $0xb0] sm:$0xf]
    %v58 = vld [vmem:[%s0 + $0xb4] sm:$0xf]
    %v59 = vld [vmem:[%s0 + $0xb8] sm:$0xf]
    %v60 = vld [vmem:[%s0 + $0xbc] sm:$0xf]
    %v61 = vld [vmem:[%s0 + $0xc0] sm:$0xf]
    %v62 = vld [vmem:[%s0 + $0xc4] sm:$0xf]
    %v63 = vld [vmem:[%s0 + $0xc8] sm:$0xf]
    %v64 = vld [vmem:[%s0 + $0xcc] sm:$0xf]
    %v65 = vld [vmem:[%s0 + $0xd0] sm:$0xf]
    %v66 = vld [vmem:[%s0 + $0xd4] sm:$0xf]
    %v67 = vld [vmem:[%s0 + $0xd8] sm:$0xf]
    %v68 = vld [vmem:[%s0 + $0xdc] sm:$0xf]
    %v69 = vld [vmem:[%s0 + $0xe0] sm:$0xf]
    %v70 = vld [vmem:[%s0 + $0xe4] sm:$0xf]
    %v71 = vld [vmem:[%s0 + $0xe8] sm:$0xf]
    %v72 = vld [vmem:[%s0 + $0xec] sm:$0xf]
    %v73 = vld [vmem:[%s0 + $0xf0] sm:$0xf]
    %v74 = vld [vmem:[%s0 + $0xf4] sm:$0xf]
    %v75 = vld [vmem:[%s0 + $0xf8] sm:$0xf]
    %v76 = vld [vmem:[%s0 + $0xfc] sm:$0xf]
    %v77 = vld [vmem:[%s1] sm:$0xf]
    %v78 = vld [vmem:[%s1 + $0x4] sm:$0xf]
    %v79 = vld [vmem:[%s1 + $0x8] sm:$0xf]
    %v80 = vld [vmem:[%s1 + $0xc] sm:$0xf]
    %v145 = vunpack.c.l.b16 %v13
    %v146 = vunpack.c.l.b16 %v14
    %v147 = vunpack.c.l.b16 %v15
    %v148 = vunpack.c.l.b16 %v16
    %v149 = vunpack.c.l.b16 %v17
    %v150 = vunpack.c.l.b16 %v18
    %v151 = vunpack.c.l.b16 %v19
    %v152 = vunpack.c.l.b16 %v20
    %v153 = vunpack.c.l.b16 %v21
    %v154 = vunpack.c.l.b16 %v22
    %v155 = vunpack.c.l.b16 %v23
    %v156 = vunpack.c.l.b16 %v24
    %v157 = vunpack.c.l.b16 %v25
    %v158 = vunpack.c.l.b16 %v26
    %v159 = vunpack.c.l.b16 %v27
    %v160 = vunpack.c.l.b16 %v28
    %v161 = vunpack.c.l.b16 %v29
    %v162 = vunpack.c.l.b16 %v30
    %v163 = vunpack.c.l.b16 %v31
    %v164 = vunpack.c.l.b16 %v32
    %v165 = vunpack.c.l.b16 %v33
    %v166 = vunpack.c.l.b16 %v34
    %v167 = vunpack.c.l.b16 %v35
    %v168 = vunpack.c.l.b16 %v36
    %v169 = vunpack.c.l.b16 %v37
    %v170 = vunpack.c.l.b16 %v38
    %v171 = vunpack.c.l.b16 %v39
    %v172 = vunpack.c.l.b16 %v40
    %v173 = vunpack.c.l.b16 %v41
    %v174 = vunpack.c.l.b16 %v42
    %v175 = vunpack.c.l.b16 %v43
    %v176 = vunpack.c.l.b16 %v44
    %v177 = vunpack.c.l.b16 %v45
    %v178 = vunpack.c.l.b16 %v46
    %v179 = vunpack.c.l.b16 %v47
    %v180 = vunpack.c.l.b16 %v48
    %v181 = vunpack.c.l.b16 %v49
    %v182 = vunpack.c.l.b16 %v50
    %v183 = vunpack.c.l.b16 %v51
    %v184 = vunpack.c.l.b16 %v52
    %v185 = vunpack.c.l.b16 %v53
    %v186 = vunpack.c.l.b16 %v54
    %v187 = vunpack.c.l.b16 %v55
    %v188 = vunpack.c.l.b16 %v56
    %v189 = vunpack.c.l.b16 %v57
    %v190 = vunpack.c.l.b16 %v58
    %v191 = vunpack.c.l.b16 %v59
    %v192 = vunpack.c.l.b16 %v60
    %v193 = vunpack.c.l.b16 %v61
    %v194 = vunpack.c.l.b16 %v62
    %v195 = vunpack.c.l.b16 %v63
    %v196 = vunpack.c.l.b16 %v64
    %v197 = vunpack.c.l.b16 %v65
    %v198 = vunpack.c.l.b16 %v66
    %v199 = vunpack.c.l.b16 %v67
    %v200 = vunpack.c.l.b16 %v68
    %v201 = vunpack.c.l.b16 %v69
    %v202 = vunpack.c.l.b16 %v70
    %v203 = vunpack.c.l.b16 %v71
    %v204 = vunpack.c.l.b16 %v72
    %v205 = vunpack.c.l.b16 %v73
    %v206 = vunpack.c.l.b16 %v74
    %v207 = vunpack.c.l.b16 %v75
    %v208 = vunpack.c.l.b16 %v76
    %v209 = vpack.c.b16 %v146, %v145
    %v210 = vpack.c.b16 %v148, %v147
    %v211 = vpack.c.b16 %v150, %v149
    %v212 = vpack.c.b16 %v152, %v151
    %v213 = vpack.c.b16 %v154, %v153
    %v214 = vpack.c.b16 %v156, %v155
    %v215 = vpack.c.b16 %v158, %v157
    %v216 = vpack.c.b16 %v160, %v159
    %v217 = vpack.c.b16 %v162, %v161
    %v218 = vpack.c.b16 %v164, %v163
    %v219 = vpack.c.b16 %v166, %v165
    %v220 = vpack.c.b16 %v168, %v167
    %v221 = vpack.c.b16 %v170, %v169
    %v222 = vpack.c.b16 %v172, %v171
    %v223 = vpack.c.b16 %v174, %v173
    %v224 = vpack.c.b16 %v176, %v175
    %v225 = vpack.c.b16 %v178, %v177
    %v226 = vpack.c.b16 %v180, %v179
    %v227 = vpack.c.b16 %v182, %v181
    %v228 = vpack.c.b16 %v184, %v183
    %v229 = vpack.c.b16 %v186, %v185
    %v230 = vpack.c.b16 %v188, %v187
    %v231 = vpack.c.b16 %v190, %v189
    %v232 = vpack.c.b16 %v192, %v191
    %v233 = vpack.c.b16 %v194, %v193
    %v234 = vpack.c.b16 %v196, %v195
    %v235 = vpack.c.b16 %v198, %v197
    %v236 = vpack.c.b16 %v200, %v199
    %v237 = vpack.c.b16 %v202, %v201
    %v238 = vpack.c.b16 %v204, %v203
    %v239 = vpack.c.b16 %v206, %v205
    %v240 = vpack.c.b16 %v208, %v207
    %v245 = vunpack.c.l.b16 %v77
    %v246 = vunpack.c.l.b16 %v78
    %v247 = vunpack.c.l.b16 %v79
    %v248 = vunpack.c.l.b16 %v80
    %v249 = vpack.c.b16 %v246, %v245
    %v250 = vpack.c.b16 %v248, %v247
    %vm253 = vcmask 261120
    %v255 = vsel %vm253, %v209, 0
    %v258 = vsel %vm253, %v210, 0
    %v261 = vsel %vm253, %v211, 0
    %v264 = vsel %vm253, %v212, 0
    %v267 = vsel %vm253, %v213, 0
    %v270 = vsel %vm253, %v214, 0
    %v273 = vsel %vm253, %v215, 0
    %v276 = vsel %vm253, %v216, 0
    %v279 = vsel %vm253, %v217, 0
    %v282 = vsel %vm253, %v218, 0
    %v285 = vsel %vm253, %v219, 0
    %v288 = vsel %vm253, %v220, 0
    %v291 = vsel %vm253, %v221, 0
    %v294 = vsel %vm253, %v222, 0
    %v297 = vsel %vm253, %v223, 0
    %v300 = vsel %vm253, %v224, 0
    %v303 = vsel %vm253, %v225, 0
    %v306 = vsel %vm253, %v226, 0
    %v309 = vsel %vm253, %v227, 0
    %v312 = vsel %vm253, %v228, 0
    %v315 = vsel %vm253, %v229, 0
    %v318 = vsel %vm253, %v230, 0
    %v321 = vsel %vm253, %v231, 0
    %v324 = vsel %vm253, %v232, 0
    %v327 = vsel %vm253, %v233, 0
    %v330 = vsel %vm253, %v234, 0
    %v333 = vsel %vm253, %v235, 0
    %v336 = vsel %vm253, %v236, 0
    %v339 = vsel %vm253, %v237, 0
    %v342 = vsel %vm253, %v238, 0
    %v345 = vsel %vm253, %v239, 0
    %v348 = vsel %vm253, %v240, 0
    %350 = vmatprep.subr.bf16.mxu0 0
    %351 = vmatpush1.bf16.msra.mxu0 %v249
    %352 = vmatprep.subr.bf16.mxu0 0
    %353 = vmatpush1.bf16.msra.mxu0 %v250
    %354 = vmatprep.subr.bf16.mxu0 0
    %355 = vmatpush1.bf16.msra.mxu0 0
    %356 = vmatprep.subr.bf16.mxu0 0
    %357 = vmatpush1.bf16.msra.mxu0 0
    %358 = vmatprep.subr.bf16.mxu0 0
    %359 = vmatpush1.bf16.msra.mxu0 0
    %360 = vmatprep.subr.bf16.mxu0 0
    %361 = vmatpush1.bf16.msra.mxu0 0
    %362 = vmatprep.subr.bf16.mxu0 0
    %363 = vmatpush1.bf16.msra.mxu0 0
    %364 = vmatprep.subr.bf16.mxu0 0
    %365 = vmatpush1.bf16.msra.mxu0 0
    %366 = vmatprep.subr.bf16.mxu0 0
    %367 = vmatpush1.bf16.msra.mxu0 0
    %368 = vmatprep.subr.bf16.mxu0 0
    %369 = vmatpush1.bf16.msra.mxu0 0
    %370 = vmatprep.subr.bf16.mxu0 0
    %371 = vmatpush1.bf16.msra.mxu0 0
    %372 = vmatprep.subr.bf16.mxu0 0
    %373 = vmatpush1.bf16.msra.mxu0 0
    %374 = vmatprep.subr.bf16.mxu0 0
    %375 = vmatpush1.bf16.msra.mxu0 0
    %376 = vmatprep.subr.bf16.mxu0 0
    %377 = vmatpush1.bf16.msra.mxu0 0
    %378 = vmatprep.subr.bf16.mxu0 0
    %379 = vmatpush1.bf16.msra.mxu0 0
    %380 = vmatprep.subr.bf16.mxu0 0
    %381 = vmatpush1.bf16.msra.mxu0 0
    %382 = vmatprep.mubr.bf16.mxu0 0
    %383 = vmatmul.mubr.bf16.gmra.mrb[0].mxu0 %v255
    %v384 = vpop.f32.mrb[0].mxu0
    %v385 = vadd.f32 0.0, %v384
    %v386 = vpop.f32.mrb[0].mxu0
    %v387 = vpop.f32.mrb[0].mxu0
    %v388 = vadd.f32 0.0, %v387
    %v389 = vpop.f32.mrb[0].mxu0
    %390 = vmatprep.mubr.bf16.mxu0 0
    %391 = vmatmul.mubr.bf16.gmra.mrb[0].mxu0 %v258
    %v392 = vpop.f32.mrb[0].mxu0
    %v393 = vadd.f32 0.0, %v392
    %v394 = vpop.f32.mrb[0].mxu0
    %v395 = vpop.f32.mrb[0].mxu0
    %v396 = vadd.f32 0.0, %v395
    %v397 = vpop.f32.mrb[0].mxu0
    %398 = vmatprep.mubr.bf16.mxu0 0
    %399 = vmatmul.mubr.bf16.gmra.mrb[0].mxu0 %v261
    %v400 = vpop.f32.mrb[0].mxu0
    %v401 = vadd.f32 0.0, %v400
    %v402 = vpop.f32.mrb[0].mxu0
    %v403 = vpop.f32.mrb[0].mxu0
    %v404 = vadd.f32 0.0, %v403
    %v405 = vpop.f32.mrb[0].mxu0
    %406 = vmatprep.mubr.bf16.mxu0 0
    %407 = vmatmul.mubr.bf16.gmra.mrb[0].mxu0 %v264
    %v408 = vpop.f32.mrb[0].mxu0
    %v409 = vadd.f32 0.0, %v408
    %v410 = vpop.f32.mrb[0].mxu0
    %v411 = vpop.f32.mrb[0].mxu0
    %v412 = vadd.f32 0.0, %v411
    %v413 = vpop.f32.mrb[0].mxu0
    %414 = vmatprep.mubr.bf16.mxu0 0
    %415 = vmatmul.mubr.bf16.gmra.mrb[0].mxu0 %v267
    %v416 = vpop.f32.mrb[0].mxu0
    %v417 = vadd.f32 0.0, %v416
    %v418 = vpop.f32.mrb[0].mxu0
    %v419 = vpop.f32.mrb[0].mxu0
    %v420 = vadd.f32 0.0, %v419
    %v421 = vpop.f32.mrb[0].mxu0
    %422 = vmatprep.mubr.bf16.mxu0 0
    %423 = vmatmul.mubr.bf16.gmra.mrb[0].mxu0 %v270
    %v424 = vpop.f32.mrb[0].mxu0
    %v425 = vadd.f32 0.0, %v424
    %v426 = vpop.f32.mrb[0].mxu0
    %v427 = vpop.f32.mrb[0].mxu0
    %v428 = vadd.f32 0.0, %v427
    %v429 = vpop.f32.mrb[0].mxu0
    %430 = vmatprep.mubr.bf16.mxu0 0
    %431 = vmatmul.mubr.bf16.gmra.mrb[0].mxu0 %v273
    %v432 = vpop.f32.mrb[0].mxu0
    %v433 = vadd.f32 0.0, %v432
    %v434 = vpop.f32.mrb[0].mxu0
    %v435 = vpop.f32.mrb[0].mxu0
    %v436 = vadd.f32 0.0, %v435
    %v437 = vpop.f32.mrb[0].mxu0
    %438 = vmatprep.mubr.bf16.mxu0 0
    %439 = vmatmul.mubr.bf16.gmra.mrb[0].mxu0 %v276
    %v440 = vpop.f32.mrb[0].mxu0
    %v441 = vadd.f32 0.0, %v440
    %v442 = vpop.f32.mrb[0].mxu0
    %v443 = vpop.f32.mrb[0].mxu0
    %v444 = vadd.f32 0.0, %v443
    %v445 = vpop.f32.mrb[0].mxu0
    %446 = vmatprep.mubr.bf16.mxu0 0
    %447 = vmatmul.mubr.bf16.gmra.mrb[0].mxu0 %v279
    %v448 = vpop.f32.mrb[0].mxu0
    %v449 = vadd.f32 0.0, %v448
    %v450 = vpop.f32.mrb[0].mxu0
    %v451 = vpop.f32.mrb[0].mxu0
    %v452 = vadd.f32 0.0, %v451
    %v453 = vpop.f32.mrb[0].mxu0
    %454 = vmatprep.mubr.bf16.mxu0 0
    %455 = vmatmul.mubr.bf16.gmra.mrb[0].mxu0 %v282
    %v456 = vpop.f32.mrb[0].mxu0
    %v457 = vadd.f32 0.0, %v456
    %v458 = vpop.f32.mrb[0].mxu0
    %v459 = vpop.f32.mrb[0].mxu0
    %v460 = vadd.f32 0.0, %v459
    %v461 = vpop.f32.mrb[0].mxu0
    %462 = vmatprep.mubr.bf16.mxu0 0
    %463 = vmatmul.mubr.bf16.gmra.mrb[0].mxu0 %v285
    %v464 = vpop.f32.mrb[0].mxu0
    %v465 = vadd.f32 0.0, %v464
    %v466 = vpop.f32.mrb[0].mxu0
    %v467 = vpop.f32.mrb[0].mxu0
    %v468 = vadd.f32 0.0, %v467
    %v469 = vpop.f32.mrb[0].mxu0
    %470 = vmatprep.mubr.bf16.mxu0 0
    %471 = vmatmul.mubr.bf16.gmra.mrb[0].mxu0 %v288
    %v472 = vpop.f32.mrb[0].mxu0
    %v473 = vadd.f32 0.0, %v472
    %v474 = vpop.f32.mrb[0].mxu0
    %v475 = vpop.f32.mrb[0].mxu0
    %v476 = vadd.f32 0.0, %v475
    %v477 = vpop.f32.mrb[0].mxu0
    %478 = vmatprep.mubr.bf16.mxu0 0
    %479 = vmatmul.mubr.bf16.gmra.mrb[0].mxu0 %v291
    %v480 = vpop.f32.mrb[0].mxu0
    %v481 = vadd.f32 0.0, %v480
    %v482 = vpop.f32.mrb[0].mxu0
    %v483 = vpop.f32.mrb[0].mxu0
    %v484 = vadd.f32 0.0, %v483
    %v485 = vpop.f32.mrb[0].mxu0
    %486 = vmatprep.mubr.bf16.mxu0 0
    %487 = vmatmul.mubr.bf16.gmra.mrb[0].mxu0 %v294
    %v488 = vpop.f32.mrb[0].mxu0
    %v489 = vadd.f32 0.0, %v488
    %v490 = vpop.f32.mrb[0].mxu0
    %v491 = vpop.f32.mrb[0].mxu0
    %v492 = vadd.f32 0.0, %v491
    %v493 = vpop.f32.mrb[0].mxu0
    %494 = vmatprep.mubr.bf16.mxu0 0
    %495 = vmatmul.mubr.bf16.gmra.mrb[0].mxu0 %v297
    %v496 = vpop.f32.mrb[0].mxu0
    %v497 = vadd.f32 0.0, %v496
    %v498 = vpop.f32.mrb[0].mxu0
    %v499 = vpop.f32.mrb[0].mxu0
    %v500 = vadd.f32 0.0, %v499
    %v501 = vpop.f32.mrb[0].mxu0
    %502 = vmatprep.mubr.bf16.mxu0 0
    %503 = vmatmul.mubr.bf16.gmra.mrb[0].mxu0 %v300
    %v504 = vpop.f32.mrb[0].mxu0
    %v505 = vadd.f32 0.0, %v504
    %v506 = vpop.f32.mrb[0].mxu0
    %v507 = vpop.f32.mrb[0].mxu0
    %v508 = vadd.f32 0.0, %v507
    %v509 = vpop.f32.mrb[0].mxu0
    %510 = vmatprep.mubr.bf16.mxu0 0
    %511 = vmatmul.mubr.bf16.gmra.mrb[0].mxu0 %v303
    %v512 = vpop.f32.mrb[0].mxu0
    %v513 = vadd.f32 0.0, %v512
    %v514 = vpop.f32.mrb[0].mxu0
    %v515 = vpop.f32.mrb[0].mxu0
    %v516 = vadd.f32 0.0, %v515
    %v517 = vpop.f32.mrb[0].mxu0
    %518 = vmatprep.mubr.bf16.mxu0 0
    %519 = vmatmul.mubr.bf16.gmra.mrb[0].mxu0 %v306
    %v520 = vpop.f32.mrb[0].mxu0
    %v521 = vadd.f32 0.0, %v520
    %v522 = vpop.f32.mrb[0].mxu0
    %v523 = vpop.f32.mrb[0].mxu0
    %v524 = vadd.f32 0.0, %v523
    %v525 = vpop.f32.mrb[0].mxu0
    %526 = vmatprep.mubr.bf16.mxu0 0
    %527 = vmatmul.mubr.bf16.gmra.mrb[0].mxu0 %v309
    %v528 = vpop.f32.mrb[0].mxu0
    %v529 = vadd.f32 0.0, %v528
    %v530 = vpop.f32.mrb[0].mxu0
    %v531 = vpop.f32.mrb[0].mxu0
    %v532 = vadd.f32 0.0, %v531
    %v533 = vpop.f32.mrb[0].mxu0
    %534 = vmatprep.mubr.bf16.mxu0 0
    %535 = vmatmul.mubr.bf16.gmra.mrb[0].mxu0 %v312
    %v536 = vpop.f32.mrb[0].mxu0
    %v537 = vadd.f32 0.0, %v536
    %v538 = vpop.f32.mrb[0].mxu0
    %v539 = vpop.f32.mrb[0].mxu0
    %v540 = vadd.f32 0.0, %v539
    %v541 = vpop.f32.mrb[0].mxu0
    %542 = vmatprep.mubr.bf16.mxu0 0
    %543 = vmatmul.mubr.bf16.gmra.mrb[0].mxu0 %v315
    %v544 = vpop.f32.mrb[0].mxu0
    %v545 = vadd.f32 0.0, %v544
    %v546 = vpop.f32.mrb[0].mxu0
    %v547 = vpop.f32.mrb[0].mxu0
    %v548 = vadd.f32 0.0, %v547
    %v549 = vpop.f32.mrb[0].mxu0
    %550 = vmatprep.mubr.bf16.mxu0 0
    %551 = vmatmul.mubr.bf16.gmra.mrb[0].mxu0 %v318
    %v552 = vpop.f32.mrb[0].mxu0
    %v553 = vadd.f32 0.0, %v552
    %v554 = vpop.f32.mrb[0].mxu0
    %v555 = vpop.f32.mrb[0].mxu0
    %v556 = vadd.f32 0.0, %v555
    %v557 = vpop.f32.mrb[0].mxu0
    %558 = vmatprep.mubr.bf16.mxu0 0
    %559 = vmatmul.mubr.bf16.gmra.mrb[0].mxu0 %v321
    %v560 = vpop.f32.mrb[0].mxu0
    %v561 = vadd.f32 0.0, %v560
    %v562 = vpop.f32.mrb[0].mxu0
    %v563 = vpop.f32.mrb[0].mxu0
    %v564 = vadd.f32 0.0, %v563
    %v565 = vpop.f32.mrb[0].mxu0
    %566 = vmatprep.mubr.bf16.mxu0 0
    %567 = vmatmul.mubr.bf16.gmra.mrb[0].mxu0 %v324
    %v568 = vpop.f32.mrb[0].mxu0
    %v569 = vadd.f32 0.0, %v568
    %v570 = vpop.f32.mrb[0].mxu0
    %v571 = vpop.f32.mrb[0].mxu0
    %v572 = vadd.f32 0.0, %v571
    %v573 = vpop.f32.mrb[0].mxu0
    %574 = vmatprep.mubr.bf16.mxu0 0
    %575 = vmatmul.mubr.bf16.gmra.mrb[0].mxu0 %v327
    %v576 = vpop.f32.mrb[0].mxu0
    %v577 = vadd.f32 0.0, %v576
    %v578 = vpop.f32.mrb[0].mxu0
    %v579 = vpop.f32.mrb[0].mxu0
    %v580 = vadd.f32 0.0, %v579
    %v581 = vpop.f32.mrb[0].mxu0
    %582 = vmatprep.mubr.bf16.mxu0 0
    %583 = vmatmul.mubr.bf16.gmra.mrb[0].mxu0 %v330
    %v584 = vpop.f32.mrb[0].mxu0
    %v585 = vadd.f32 0.0, %v584
    %v586 = vpop.f32.mrb[0].mxu0
    %v587 = vpop.f32.mrb[0].mxu0
    %v588 = vadd.f32 0.0, %v587
    %v589 = vpop.f32.mrb[0].mxu0
    %590 = vmatprep.mubr.bf16.mxu0 0
    %591 = vmatmul.mubr.bf16.gmra.mrb[0].mxu0 %v333
    %v592 = vpop.f32.mrb[0].mxu0
    %v593 = vadd.f32 0.0, %v592
    %v594 = vpop.f32.mrb[0].mxu0
    %v595 = vpop.f32.mrb[0].mxu0
    %v596 = vadd.f32 0.0, %v595
    %v597 = vpop.f32.mrb[0].mxu0
    %598 = vmatprep.mubr.bf16.mxu0 0
    %599 = vmatmul.mubr.bf16.gmra.mrb[0].mxu0 %v336
    %v600 = vpop.f32.mrb[0].mxu0
    %v601 = vadd.f32 0.0, %v600
    %v602 = vpop.f32.mrb[0].mxu0
    %v603 = vpop.f32.mrb[0].mxu0
    %v604 = vadd.f32 0.0, %v603
    %v605 = vpop.f32.mrb[0].mxu0
    %606 = vmatprep.mubr.bf16.mxu0 0
    %607 = vmatmul.mubr.bf16.gmra.mrb[0].mxu0 %v339
    %v608 = vpop.f32.mrb[0].mxu0
    %v609 = vadd.f32 0.0, %v608
    %v610 = vpop.f32.mrb[0].mxu0
    %v611 = vpop.f32.mrb[0].mxu0
    %v612 = vadd.f32 0.0, %v611
    %v613 = vpop.f32.mrb[0].mxu0
    %614 = vmatprep.mubr.bf16.mxu0 0
    %615 = vmatmul.mubr.bf16.gmra.mrb[0].mxu0 %v342
    %v616 = vpop.f32.mrb[0].mxu0
    %v617 = vadd.f32 0.0, %v616
    %v618 = vpop.f32.mrb[0].mxu0
    %v619 = vpop.f32.mrb[0].mxu0
    %v620 = vadd.f32 0.0, %v619
    %v621 = vpop.f32.mrb[0].mxu0
    %622 = vmatprep.mubr.bf16.mxu0 0
    %623 = vmatmul.mubr.bf16.gmra.mrb[0].mxu0 %v345
    %v624 = vpop.f32.mrb[0].mxu0
    %v625 = vadd.f32 0.0, %v624
    %v626 = vpop.f32.mrb[0].mxu0
    %v627 = vpop.f32.mrb[0].mxu0
    %v628 = vadd.f32 0.0, %v627
    %v629 = vpop.f32.mrb[0].mxu0
    %630 = vmatprep.mubr.bf16.mxu0 0
    %631 = vmatmul.mubr.bf16.gmra.mrb[0].mxu0 %v348
    %v632 = vpop.f32.mrb[0].mxu0
    %v633 = vadd.f32 0.0, %v632
    %v634 = vpop.f32.mrb[0].mxu0
    %v635 = vpop.f32.mrb[0].mxu0
    %v636 = vadd.f32 0.0, %v635
    %v637 = vpop.f32.mrb[0].mxu0
    %638 = vdwg.mxu0
    %v639 = vmul.f32 %v385, 0.29730177
    %v640 = vmul.f32 %v388, 0.29730177
    %v641 = vmul.f32 %v393, 0.29730177
    %v642 = vmul.f32 %v396, 0.29730177
    %v643 = vmul.f32 %v401, 0.29730177
    %v644 = vmul.f32 %v404, 0.29730177
    %v645 = vmul.f32 %v409, 0.29730177
    %v646 = vmul.f32 %v412, 0.29730177
    %v647 = vmul.f32 %v417, 0.29730177
    %v648 = vmul.f32 %v420, 0.29730177
    %v649 = vmul.f32 %v425, 0.29730177
    %v650 = vmul.f32 %v428, 0.29730177
    %v651 = vmul.f32 %v433, 0.29730177
    %v652 = vmul.f32 %v436, 0.29730177
    %v653 = vmul.f32 %v441, 0.29730177
    %v654 = vmul.f32 %v444, 0.29730177
    %v655 = vmul.f32 %v449, 0.29730177
    %v656 = vmul.f32 %v452, 0.29730177
    %v657 = vmul.f32 %v457, 0.29730177
    %v658 = vmul.f32 %v460, 0.29730177
    %v659 = vmul.f32 %v465, 0.29730177
    %v660 = vmul.f32 %v468, 0.29730177
    %v661 = vmul.f32 %v473, 0.29730177
    %v662 = vmul.f32 %v476, 0.29730177
    %v663 = vmul.f32 %v481, 0.29730177
    %v664 = vmul.f32 %v484, 0.29730177
    %v665 = vmul.f32 %v489, 0.29730177
    %v666 = vmul.f32 %v492, 0.29730177
    %v667 = vmul.f32 %v497, 0.29730177
    %v668 = vmul.f32 %v500, 0.29730177
    %v669 = vmul.f32 %v505, 0.29730177
    %v670 = vmul.f32 %v508, 0.29730177
    %v671 = vmul.f32 %v513, 0.29730177
    %v672 = vmul.f32 %v516, 0.29730177
    %v673 = vmul.f32 %v521, 0.29730177
    %v674 = vmul.f32 %v524, 0.29730177
    %v675 = vmul.f32 %v529, 0.29730177
    %v676 = vmul.f32 %v532, 0.29730177
    %v677 = vmul.f32 %v537, 0.29730177
    %v678 = vmul.f32 %v540, 0.29730177
    %v679 = vmul.f32 %v545, 0.29730177
    %v680 = vmul.f32 %v548, 0.29730177
    %v681 = vmul.f32 %v553, 0.29730177
    %v682 = vmul.f32 %v556, 0.29730177
    %v683 = vmul.f32 %v561, 0.29730177
    %v684 = vmul.f32 %v564, 0.29730177
    %v685 = vmul.f32 %v569, 0.29730177
    %v686 = vmul.f32 %v572, 0.29730177
    %v687 = vmul.f32 %v577, 0.29730177
    %v688 = vmul.f32 %v580, 0.29730177
    %v689 = vmul.f32 %v585, 0.29730177
    %v690 = vmul.f32 %v588, 0.29730177
    %v691 = vmul.f32 %v593, 0.29730177
    %v692 = vmul.f32 %v596, 0.29730177
    %v693 = vmul.f32 %v601, 0.29730177
    %v694 = vmul.f32 %v604, 0.29730177
    %v695 = vmul.f32 %v609, 0.29730177
    %v696 = vmul.f32 %v612, 0.29730177
    %v697 = vmul.f32 %v617, 0.29730177
    %v698 = vmul.f32 %v620, 0.29730177
    %v699 = vmul.f32 %v625, 0.29730177
    %v700 = vmul.f32 %v628, 0.29730177
    %v701 = vmul.f32 %v633, 0.29730177
    %v702 = vmul.f32 %v636, 0.29730177
    %v703 = vpack.c.bf16 %v640, %v639
    %v704 = vpack.c.bf16 %v642, %v641
    %v705 = vpack.c.bf16 %v644, %v643
    %v706 = vpack.c.bf16 %v646, %v645
    %v707 = vpack.c.bf16 %v648, %v647
    %v708 = vpack.c.bf16 %v650, %v649
    %v709 = vpack.c.bf16 %v652, %v651
    %v710 = vpack.c.bf16 %v654, %v653
    %v711 = vpack.c.bf16 %v656, %v655
    %v712 = vpack.c.bf16 %v658, %v657
    %v713 = vpack.c.bf16 %v660, %v659
    %v714 = vpack.c.bf16 %v662, %v661
    %v715 = vpack.c.bf16 %v664, %v663
    %v716 = vpack.c.bf16 %v666, %v665
    %v717 = vpack.c.bf16 %v668, %v667
    %v718 = vpack.c.bf16 %v670, %v669
    %v719 = vpack.c.bf16 %v672, %v671
    %v720 = vpack.c.bf16 %v674, %v673
    %v721 = vpack.c.bf16 %v676, %v675
    %v722 = vpack.c.bf16 %v678, %v677
    %v723 = vpack.c.bf16 %v680, %v679
    %v724 = vpack.c.bf16 %v682, %v681
    %v725 = vpack.c.bf16 %v684, %v683
    %v726 = vpack.c.bf16 %v686, %v685
    %v727 = vpack.c.bf16 %v688, %v687
    %v728 = vpack.c.bf16 %v690, %v689
    %v729 = vpack.c.bf16 %v692, %v691
    %v730 = vpack.c.bf16 %v694, %v693
    %v731 = vpack.c.bf16 %v696, %v695
    %v732 = vpack.c.bf16 %v698, %v697
    %v733 = vpack.c.bf16 %v700, %v699
    %v734 = vpack.c.bf16 %v702, %v701
    %v767 = vunpack.c.l.b16 %v703
    %v768 = vunpack.c.h.b16 %v703
    %v769 = vunpack.c.l.b16 %v704
    %v770 = vunpack.c.h.b16 %v704
    %v771 = vunpack.c.l.b16 %v705
    %v772 = vunpack.c.h.b16 %v705
    %v773 = vunpack.c.l.b16 %v706
    %v774 = vunpack.c.h.b16 %v706
    %v775 = vunpack.c.l.b16 %v707
    %v776 = vunpack.c.h.b16 %v707
    %v777 = vunpack.c.l.b16 %v708
    %v778 = vunpack.c.h.b16 %v708
    %v779 = vunpack.c.l.b16 %v709
    %v780 = vunpack.c.h.b16 %v709
    %v781 = vunpack.c.l.b16 %v710
    %v782 = vunpack.c.h.b16 %v710
    %v783 = vunpack.c.l.b16 %v711
    %v784 = vunpack.c.h.b16 %v711
    %v785 = vunpack.c.l.b16 %v712
    %v786 = vunpack.c.h.b16 %v712
    %v787 = vunpack.c.l.b16 %v713
    %v788 = vunpack.c.h.b16 %v713
    %v789 = vunpack.c.l.b16 %v714
    %v790 = vunpack.c.h.b16 %v714
    %v791 = vunpack.c.l.b16 %v715
    %v792 = vunpack.c.h.b16 %v715
    %v793 = vunpack.c.l.b16 %v716
    %v794 = vunpack.c.h.b16 %v716
    %v795 = vunpack.c.l.b16 %v717
    %v796 = vunpack.c.h.b16 %v717
    %v797 = vunpack.c.l.b16 %v718
    %v798 = vunpack.c.h.b16 %v718
    %v799 = vunpack.c.l.b16 %v719
    %v800 = vunpack.c.h.b16 %v719
    %v801 = vunpack.c.l.b16 %v720
    %v802 = vunpack.c.h.b16 %v720
    %v803 = vunpack.c.l.b16 %v721
    %v804 = vunpack.c.h.b16 %v721
    %v805 = vunpack.c.l.b16 %v722
    %v806 = vunpack.c.h.b16 %v722
    %v807 = vunpack.c.l.b16 %v723
    %v808 = vunpack.c.h.b16 %v723
    %v809 = vunpack.c.l.b16 %v724
    %v810 = vunpack.c.h.b16 %v724
    %v811 = vunpack.c.l.b16 %v725
    %v812 = vunpack.c.h.b16 %v725
    %v813 = vunpack.c.l.b16 %v726
    %v814 = vunpack.c.h.b16 %v726
    %v815 = vunpack.c.l.b16 %v727
    %v816 = vunpack.c.h.b16 %v727
    %v817 = vunpack.c.l.b16 %v728
    %v818 = vunpack.c.h.b16 %v728
    %v819 = vunpack.c.l.b16 %v729
    %v820 = vunpack.c.h.b16 %v729
    %v821 = vunpack.c.l.b16 %v730
    %v822 = vunpack.c.h.b16 %v730
    %v823 = vunpack.c.l.b16 %v731
    %v824 = vunpack.c.h.b16 %v731
    %v825 = vunpack.c.l.b16 %v732
    %v826 = vunpack.c.h.b16 %v732
    %v827 = vunpack.c.l.b16 %v733
    %v828 = vunpack.c.h.b16 %v733
    %v829 = vunpack.c.l.b16 %v734
    %v830 = vunpack.c.h.b16 %v734
    %v831 = vpack.c.b16 %v767, %v767
    %v832 = vpack.c.b16 %v768, %v768
    %v833 = vpack.c.b16 %v769, %v769
    %v834 = vpack.c.b16 %v770, %v770
    %v835 = vpack.c.b16 %v771, %v771
    %v836 = vpack.c.b16 %v772, %v772
    %v837 = vpack.c.b16 %v773, %v773
    %v838 = vpack.c.b16 %v774, %v774
    %v839 = vpack.c.b16 %v775, %v775
    %v840 = vpack.c.b16 %v776, %v776
    %v841 = vpack.c.b16 %v777, %v777
    %v842 = vpack.c.b16 %v778, %v778
    %v843 = vpack.c.b16 %v779, %v779
    %v844 = vpack.c.b16 %v780, %v780
    %v845 = vpack.c.b16 %v781, %v781
    %v846 = vpack.c.b16 %v782, %v782
    %v847 = vpack.c.b16 %v783, %v783
    %v848 = vpack.c.b16 %v784, %v784
    %v849 = vpack.c.b16 %v785, %v785
    %v850 = vpack.c.b16 %v786, %v786
    %v851 = vpack.c.b16 %v787, %v787
    %v852 = vpack.c.b16 %v788, %v788
    %v853 = vpack.c.b16 %v789, %v789
    %v854 = vpack.c.b16 %v790, %v790
    %v855 = vpack.c.b16 %v791, %v791
    %v856 = vpack.c.b16 %v792, %v792
    %v857 = vpack.c.b16 %v793, %v793
    %v858 = vpack.c.b16 %v794, %v794
    %v859 = vpack.c.b16 %v795, %v795
    %v860 = vpack.c.b16 %v796, %v796
    %v861 = vpack.c.b16 %v797, %v797
    %v862 = vpack.c.b16 %v798, %v798
    %v863 = vpack.c.b16 %v799, %v799
    %v864 = vpack.c.b16 %v800, %v800
    %v865 = vpack.c.b16 %v801, %v801
    %v866 = vpack.c.b16 %v802, %v802
    %v867 = vpack.c.b16 %v803, %v803
    %v868 = vpack.c.b16 %v804, %v804
    %v869 = vpack.c.b16 %v805, %v805
    %v870 = vpack.c.b16 %v806, %v806
    %v871 = vpack.c.b16 %v807, %v807
    %v872 = vpack.c.b16 %v808, %v808
    %v873 = vpack.c.b16 %v809, %v809
    %v874 = vpack.c.b16 %v810, %v810
    %v875 = vpack.c.b16 %v811, %v811
    %v876 = vpack.c.b16 %v812, %v812
    %v877 = vpack.c.b16 %v813, %v813
    %v878 = vpack.c.b16 %v814, %v814
    %v879 = vpack.c.b16 %v815, %v815
    %v880 = vpack.c.b16 %v816, %v816
    %v881 = vpack.c.b16 %v817, %v817
    %v882 = vpack.c.b16 %v818, %v818
    %v883 = vpack.c.b16 %v819, %v819
    %v884 = vpack.c.b16 %v820, %v820
    %v885 = vpack.c.b16 %v821, %v821
    %v886 = vpack.c.b16 %v822, %v822
    %v887 = vpack.c.b16 %v823, %v823
    %v888 = vpack.c.b16 %v824, %v824
    %v889 = vpack.c.b16 %v825, %v825
    %v890 = vpack.c.b16 %v826, %v826
    %v891 = vpack.c.b16 %v827, %v827
    %v892 = vpack.c.b16 %v828, %v828
    %v893 = vpack.c.b16 %v829, %v829
    %v894 = vpack.c.b16 %v830, %v830
    %959 = vst [vmem:[#allocation2] sm:$0xf] %v831
    %960 = vst [vmem:[#allocation2 + $0x4] sm:$0xf] %v832
    %961 = vst [vmem:[#allocation2 + $0x8] sm:$0xf] %v833
    %962 = vst [vmem:[#allocation2 + $0xc] sm:$0xf] %v834
    %963 = vst [vmem:[#allocation2 + $0x10] sm:$0xf] %v835
    %964 = vst [vmem:[#allocation2 + $0x14] sm:$0xf] %v836
    %965 = vst [vmem:[#allocation2 + $0x18] sm:$0xf] %v837
    %966 = vst [vmem:[#allocation2 + $0x1c] sm:$0xf] %v838
    %967 = vst [vmem:[#allocation2 + $0x20] sm:$0xf] %v839
    %968 = vst [vmem:[#allocation2 + $0x24] sm:$0xf] %v840
    %969 = vst [vmem:[#allocation2 + $0x28] sm:$0xf] %v841
    %970 = vst [vmem:[#allocation2 + $0x2c] sm:$0xf] %v842
    %971 = vst [vmem:[#allocation2 + $0x30] sm:$0xf] %v843
    %972 = vst [vmem:[#allocation2 + $0x34] sm:$0xf] %v844
    %973 = vst [vmem:[#allocation2 + $0x38] sm:$0xf] %v845
    %974 = vst [vmem:[#allocation2 + $0x3c] sm:$0xf] %v846
    %975 = vst [vmem:[#allocation2 + $0x40] sm:$0xf] %v847
    %976 = vst [vmem:[#allocation2 + $0x44] sm:$0xf] %v848
    %977 = vst [vmem:[#allocation2 + $0x48] sm:$0xf] %v849
    %978 = vst [vmem:[#allocation2 + $0x4c] sm:$0xf] %v850
    %979 = vst [vmem:[#allocation2 + $0x50] sm:$0xf] %v851
    %980 = vst [vmem:[#allocation2 + $0x54] sm:$0xf] %v852
    %981 = vst [vmem:[#allocation2 + $0x58] sm:$0xf] %v853
    %982 = vst [vmem:[#allocation2 + $0x5c] sm:$0xf] %v854
    %983 = vst [vmem:[#allocation2 + $0x60] sm:$0xf] %v855
    %984 = vst [vmem:[#allocation2 + $0x64] sm:$0xf] %v856
    %985 = vst [vmem:[#allocation2 + $0x68] sm:$0xf] %v857
    %986 = vst [vmem:[#allocation2 + $0x6c] sm:$0xf] %v858
    %987 = vst [vmem:[#allocation2 + $0x70] sm:$0xf] %v859
    %988 = vst [vmem:[#allocation2 + $0x74] sm:$0xf] %v860
    %989 = vst [vmem:[#allocation2 + $0x78] sm:$0xf] %v861
    %990 = vst [vmem:[#allocation2 + $0x7c] sm:$0xf] %v862
    %991 = vst [vmem:[#allocation2 + $0x80] sm:$0xf] %v863
    %992 = vst [vmem:[#allocation2 + $0x84] sm:$0xf] %v864
    %993 = vst [vmem:[#allocation2 + $0x88] sm:$0xf] %v865
    %994 = vst [vmem:[#allocation2 + $0x8c] sm:$0xf] %v866
    %995 = vst [vmem:[#allocation2 + $0x90] sm:$0xf] %v867
    %996 = vst [vmem:[#allocation2 + $0x94] sm:$0xf] %v868
    %997 = vst [vmem:[#allocation2 + $0x98] sm:$0xf] %v869
    %998 = vst [vmem:[#allocation2 + $0x9c] sm:$0xf] %v870
    %999 = vst [vmem:[#allocation2 + $0xa0] sm:$0xf] %v871
    %1000 = vst [vmem:[#allocation2 + $0xa4] sm:$0xf] %v872
    %1001 = vst [vmem:[#allocation2 + $0xa8] sm:$0xf] %v873
    %1002 = vst [vmem:[#allocation2 + $0xac] sm:$0xf] %v874
    %1003 = vst [vmem:[#allocation2 + $0xb0] sm:$0xf] %v875
    %1004 = vst [vmem:[#allocation2 + $0xb4] sm:$0xf] %v876
    %1005 = vst [vmem:[#allocation2 + $0xb8] sm:$0xf] %v877
    %1006 = vst [vmem:[#allocation2 + $0xbc] sm:$0xf] %v878
    %1007 = vst [vmem:[#allocation2 + $0xc0] sm:$0xf] %v879
    %1008 = vst [vmem:[#allocation2 + $0xc4] sm:$0xf] %v880
    %1009 = vst [vmem:[#allocation2 + $0xc8] sm:$0xf] %v881
    %1010 = vst [vmem:[#allocation2 + $0xcc] sm:$0xf] %v882
    %1011 = vst [vmem:[#allocation2 + $0xd0] sm:$0xf] %v883
    %1012 = vst [vmem:[#allocation2 + $0xd4] sm:$0xf] %v884
    %1013 = vst [vmem:[#allocation2 + $0xd8] sm:$0xf] %v885
    %1014 = vst [vmem:[#allocation2 + $0xdc] sm:$0xf] %v886
    %1015 = vst [vmem:[#allocation2 + $0xe0] sm:$0xf] %v887
    %1016 = vst [vmem:[#allocation2 + $0xe4] sm:$0xf] %v888
    %1017 = vst [vmem:[#allocation2 + $0xe8] sm:$0xf] %v889
    %1018 = vst [vmem:[#allocation2 + $0xec] sm:$0xf] %v890
    %1019 = vst [vmem:[#allocation2 + $0xf0] sm:$0xf] %v891
    %1020 = vst [vmem:[#allocation2 + $0xf4] sm:$0xf] %v892
    %1021 = vst [vmem:[#allocation2 + $0xf8] sm:$0xf] %v893
    %1022 = vst [vmem:[#allocation2 + $0xfc] sm:$0xf] %v894
    // Predicated region
    $region10: #{tpu_custom_call.1} parent=1 // pred_check
      _
    $region11: #{tpu_custom_call.1} parent=1 // pred_check_branch
      %1024 = sbr.rel (0) target = $region13
    $region12: #{tpu_custom_call.1} parent=1 // pred_region
      %s1026 = ssub.s32 4096, 4096
      %1027 = vsyncadd [#allocation3], %s1026
      %s1028 = sshll.u32 [#allocation2], 4
      %s1029 = int_to_ptr.vmem [resolvable:$true] %s1028
      %1034 = dma.vmem_to_hbm [thread:$0]  %s1029, 4096, %s2, [#allocation3], 64, 64, 4
    $region13: #{tpu_custom_call.1} parent=1 // pred_fallthru
      _
    // Predicated region
    $region14: #{tpu_custom_call.1} parent=1 // pred_check
      _
    $region15: #{tpu_custom_call.1} parent=1 // pred_check_branch
      %1036 = sbr.rel (0) target = $region17
    $region16: #{tpu_custom_call.1} parent=1 // pred_region
      %1037 = dma.done [#allocation3], 4096
    $region17: #{tpu_custom_call.1} parent=1 // pred_fallthru
      _
    %1038 = vsyncpa [#allocation3], 1

</llo_original>
